<compile_context>
chip_gen: v6e
topology: v6e:2x2x1
jax: 0.10.0
libtpu: 0.0.40
codegen_flags: <defaults>
</compile_context>

<pallas_src>
import jax
import jax.numpy as jnp
import numpy as np
from jax.experimental import pallas as pl
from jax.experimental.pallas import tpu as pltpu


def _round_up(x, m):
    return ((x + m - 1) // m) * m


def _time_encode_kernel(ts_ref, w_ref, phase_ref, out_ref):
    """One row tile.

    ts_ref   : (tm, pack)      timestamps; `pack` original rows per packed row
    w_ref    : (pack, lanes)   block-diagonal freq expansion weights (resident)
    phase_ref: (1, lanes)      phase tiled `pack` times (resident)
    out_ref  : (tm, lanes)     lane-dense output tile
    """
    # MXU does both the lane expansion and the ts*freq multiply; HIGHEST keeps
    # full f32 precision (default would truncate to ~bf16 mantissa).
    s = jnp.dot(ts_ref[...], w_ref[...],
                preferred_element_type=jnp.float32,
                precision=jax.lax.Precision.HIGHEST)
    # NOTE(v6e triage): the phase add could be folded into the matmul via an
    # appended ones-column in ts; kept as a single VPU add pending measurement.
    out_ref[...] = jnp.cos(s + phase_ref[...]).astype(out_ref.dtype)


def time_encode(ts, basis_freq, phase, *, row_tile=8192, out_dtype=jnp.float32,
                force_pallas=False):
    """TimeEncode forward: cos(ts[..., None] * basis_freq + phase).

    ts: (B, L) float -> (B, L, D) out_dtype.
    """
    B, L = ts.shape
    D = int(basis_freq.shape[0])
    rows = B * L

    ts = ts.astype(jnp.float32)
    basis_freq = basis_freq.astype(jnp.float32)
    phase = phase.astype(jnp.float32)

    # Tiny inputs: pallas launch / pipeline prologue dominates; let XLA fuse.
    if not force_pallas and rows * D < (1 << 16):
        return jnp.cos(ts[:, :, None] * basis_freq[None, None, :]
                       + phase[None, None, :]).astype(out_dtype)

    # Feature-dim padding so the packed output row is exactly 128 lanes wide
    # (or a multiple of 128 when D > 128) -> always unmasked lane-dense stores.
    if D <= 128:
        d_pad = max(1, int(pl.next_power_of_2(D)))      # divisor of 128
        pack = 128 // d_pad
        lanes = 128
    else:
        d_pad = _round_up(D, 128)
        pack = 1
        lanes = d_pad

    itemsize = jnp.dtype(out_dtype).itemsize
    sub = 8 if itemsize >= 4 else (16 if itemsize == 2 else 32)

    packed_rows_raw = pl.cdiv(rows, pack)
    # Cap the tile at ~half the work so the parallel axis has >= 2 grid steps
    # (keeps both v7x TensorCores busy), then round to the sublane multiple.
    half = _round_up(pl.cdiv(packed_rows_raw, 2), sub)
    tm = max(sub, min(_round_up(row_tile, sub), half))

    # Pad packed rows only to the sublane multiple (NOT a full tile); Pallas
    # masks the partial last block via pl.cdiv grid sizing.
    packed_rows = _round_up(packed_rows_raw, sub)
    padded_rows = packed_rows * pack
    grid = pl.cdiv(packed_rows, tm)

    ts_flat = ts.reshape(rows)
    if padded_rows != rows:
        ts_flat = jnp.pad(ts_flat, (0, padded_rows - rows))
    ts_packed = ts_flat.reshape(packed_rows, pack)

    # Resident constants: block-diagonal freq-expansion weights + tiled phase.
    bf = basis_freq if d_pad == D else jnp.pad(basis_freq, (0, d_pad - D))
    ph = phase if d_pad == D else jnp.pad(phase, (0, d_pad - D))
    w = (jnp.eye(pack, dtype=jnp.float32)[:, :, None]
         * bf[None, None, :]).reshape(pack, lanes)
    phase_row = jnp.tile(ph, pack).reshape(1, lanes)

    # VMEM budget: ts block lane-pads to 128 lanes, so per buffer it costs
    # tm*512 B; double-buffered in + out plus the resident constants.
    ts_blk_bytes = tm * 128 * 4
    out_blk_bytes = tm * lanes * itemsize
    vmem_need = 2 * (ts_blk_bytes + out_blk_bytes) + 2 * (pack + 1) * lanes * 4
    vmem_limit = int(min(48 << 20, max(16 << 20, vmem_need + (2 << 20))))

    cost = pl.CostEstimate(
        flops=2 * rows * D,
        transcendentals=rows * D,
        bytes_accessed=rows * 4 + rows * D * itemsize,
    )

    out_packed = pl.pallas_call(
        _time_encode_kernel,
        out_shape=jax.ShapeDtypeStruct((packed_rows, lanes), out_dtype),
        grid_spec=pltpu.PrefetchScalarGridSpec(
            num_scalar_prefetch=0,
            grid=(grid,),
            in_specs=[
                pl.BlockSpec((tm, pack), lambda i: (i, 0)),     # timestamps
                pl.BlockSpec((pack, lanes), lambda i: (0, 0)),  # freq weights
                pl.BlockSpec((1, lanes), lambda i: (0, 0)),     # phase row
            ],
            out_specs=pl.BlockSpec((tm, lanes), lambda i: (i, 0)),
        ),
        compiler_params=pltpu.CompilerParams(
            dimension_semantics=("parallel",),
            vmem_limit_bytes=vmem_limit,
        ),
        cost_estimate=cost,
    )(ts_packed, w, phase_row)

    # Row-major reshape back; slices are only taken when padding occurred
    # (they force a copy, so padding is kept to the sublane minimum).
    out = out_packed.reshape(padded_rows, d_pad)
    if padded_rows != rows:
        out = out[:rows]
    if d_pad != D:
        out = out[:, :D]
    return out.reshape(B, L, D)


if __name__ == "__main__":
    # Module config (deterministic, matches TimeEncode.__init__)
    expand_dim = 32  # time_dim D
    basis_freq = jnp.asarray(1.0 / 10 ** np.linspace(0, 9, expand_dim),
                             dtype=jnp.float32)
    phase = jnp.zeros((expand_dim,), dtype=jnp.float32)

    key = jax.random.PRNGKey(0)
    k1, k2, k3 = jax.random.split(key, 3)

    def ref(ts, bf, ph):
        return jnp.cos(ts[:, :, None] * bf[None, None, :] + ph[None, None, :])

    # Small demo shape (batch=2, seq=8); force the Pallas path so the kernel runs.
    ts_small = jax.random.uniform(k1, (2, 8), dtype=jnp.float32) * 100.0
    out_small = jax.block_until_ready(
        time_encode(ts_small, basis_freq, phase, force_pallas=True))
    np.testing.assert_allclose(np.asarray(out_small),
                               np.asarray(ref(ts_small, basis_freq, phase)),
                               rtol=1e-5, atol=1e-5)

    # Ragged, larger shape exercising sublane padding + lane packing + 2-step grid.
    ts_big = jax.random.uniform(k2, (3, 1000), dtype=jnp.float32) * 100.0
    out_big = jax.block_until_ready(
        time_encode(ts_big, basis_freq, phase, force_pallas=True))
    np.testing.assert_allclose(np.asarray(out_big),
                               np.asarray(ref(ts_big, basis_freq, phase)),
                               rtol=1e-5, atol=1e-5)

    # Feature dim that does not divide 128 (D=20 -> padded to 32 lanes/feature).
    d_odd = 20
    bf_odd = jnp.asarray(1.0 / 10 ** np.linspace(0, 9, d_odd), dtype=jnp.float32)
    ph_odd = jnp.zeros((d_odd,), dtype=jnp.float32)
    ts_odd = jax.random.uniform(k3, (4, 37), dtype=jnp.float32) * 100.0
    out_odd = jax.block_until_ready(
        time_encode(ts_odd, bf_odd, ph_odd, force_pallas=True))
    np.testing.assert_allclose(np.asarray(out_odd),
                               np.asarray(ref(ts_odd, bf_odd, ph_odd)),
                               rtol=1e-5, atol=1e-5)

    print("KERNEL_OK")
</pallas_src>

<mosaic_0001>
module attributes {stable_mosaic.version = 11 : i64} {
  func.func @_time_encode_kernel(%arg0: i32, %arg1: memref<8x4xf32, #tpu.memory_space<vmem>>, %arg2: memref<4x128xf32, #tpu.memory_space<vmem>>, %arg3: memref<1x128xf32, #tpu.memory_space<vmem>>, %arg4: memref<8x128xf32, #tpu.memory_space<vmem>>) attributes {dimension_semantics = [#tpu.dimension_semantics<parallel>], iteration_bounds = array<i64: 1>, scalar_prefetch = 0 : i64, scratch_operands = 0 : i64, tpu.core_type = #tpu.core_type<tc>, window_params = [{transform_indices = @transform_0, window_bounds = array<i64: 8, 4>}, {pipeline_mode = #tpu.pipeline_mode<synchronous>, transform_indices = @transform_1, window_bounds = array<i64: 4, 128>}, {pipeline_mode = #tpu.pipeline_mode<synchronous>, transform_indices = @transform_2, window_bounds = array<i64: 1, 128>}, {transform_indices = @transform_3, window_bounds = array<i64: 8, 128>}]} {
    %c0 = arith.constant 0 : index
    %c0_0 = arith.constant 0 : index
    %0 = vector.load %arg1[%c0, %c0_0] : memref<8x4xf32, #tpu.memory_space<vmem>>, vector<8x4xf32>
    %c0_1 = arith.constant 0 : index
    %c0_2 = arith.constant 0 : index
    %1 = vector.load %arg2[%c0_1, %c0_2] : memref<4x128xf32, #tpu.memory_space<vmem>>, vector<4x128xf32>
    %cst = arith.constant dense<0.000000e+00> : vector<8x128xf32>
    %2 = tpu.matmul %0, %1, %cst {dimension_numbers = #tpu.dot_dimension_numbers<[1], [0], [0], [1], [0, 0, 1, 1], [], []>, precision = #tpu.contract_precision<fp32>} : vector<8x4xf32>, vector<4x128xf32>, vector<8x128xf32> -> vector<8x128xf32>
    %c0_3 = arith.constant 0 : index
    %c0_4 = arith.constant 0 : index
    %3 = vector.load %arg3[%c0_3, %c0_4] : memref<1x128xf32, #tpu.memory_space<vmem>>, vector<1x128xf32>
    %4 = vector.broadcast %3 : vector<1x128xf32> to vector<8x128xf32>
    %5 = arith.addf %2, %4 : vector<8x128xf32>
    %6 = math.cos %5 : vector<8x128xf32>
    %c0_5 = arith.constant 0 : index
    %c0_6 = arith.constant 0 : index
    %7 = vector.load %arg4[%c0_5, %c0_6] : memref<8x128xf32, #tpu.memory_space<vmem>>, vector<8x128xf32>
    tpu.vector_store %arg4[%c0_5, %c0_6], %6 {strides = array<i32>} : memref<8x128xf32, #tpu.memory_space<vmem>>, vector<8x128xf32>,
    return
  }
  func.func @transform_0(%arg0: i32) -> (i32, i32) {
    %c0_i32 = arith.constant 0 : i32
    %c0_i32_0 = arith.constant 0 : i32
    return %arg0, %c0_i32 : i32, i32
  }
  func.func @transform_1(%arg0: i32) -> (i32, i32) {
    %c0_i32 = arith.constant 0 : i32
    %c0_i32_0 = arith.constant 0 : i32
    %c0_i32_1 = arith.constant 0 : i32
    return %c0_i32, %c0_i32_0 : i32, i32
  }
  func.func @transform_2(%arg0: i32) -> (i32, i32) {
    %c0_i32 = arith.constant 0 : i32
    %c0_i32_0 = arith.constant 0 : i32
    %c0_i32_1 = arith.constant 0 : i32
    return %c0_i32, %c0_i32_0 : i32, i32
  }
  func.func @transform_3(%arg0: i32) -> (i32, i32) {
    %c0_i32 = arith.constant 0 : i32
    %c0_i32_0 = arith.constant 0 : i32
    return %arg0, %c0_i32 : i32, i32
  }
}

</mosaic_0001>

<llo_original>
// kernel: tpu_custom_call.1
$region0: #{tpu_custom_call.1}
  #allocation0 [shape = 'u32[]', space=smem, size = 0x4, offset = 0x4, fixed_abs, tag = 'smem constant byte address 0x4 - core index']
  #allocation1 [shape = 'u32[144,128]{1,0:T(1,128)}', space=vmem, size = 0x12000, scoped, tag = 'internal scratch']
  %s0 = inlined_call_operand.vmem [shape: f32[8,4], index: 0, kind: input, shape index: {}]
  %s1 = inlined_call_operand.vmem [shape: f32[4,128], index: 1, kind: input, shape index: {}]
  %s2 = inlined_call_operand.vmem [shape: f32[1,128], index: 2, kind: input, shape index: {}]
  %s3 = inlined_call_operand.hbm [shape: f32[8,128], index: 3, kind: output, shape index: {}]
  %s4 = sld [smem:[#allocation0]]
  $region22: #{tpu_custom_call.1} parent=0
    _
  %s6 = ssub.s32 1, %s4
  %s7 = scalar_select 0, %s6, %s4
  $region1: #{tpu_custom_call.1} parent=0
    #allocation2 [shape = 'u8[4096]{0}', space=vmem, size = 0x1000, scoped, tag = 'output window, operand 0, single buffered']
    #allocation3 [shape = 's32[1]{0}', space=sflag, size = 0x4, scoped, tag = 'scoped memory for tpu_custom_call.1']
    %8 = vsyncpa [#allocation3], 0
    // Predicated region
    $region2: #{tpu_custom_call.1} parent=1 // pred_check
      _
    $region3: #{tpu_custom_call.1} parent=1 // pred_check_branch
      %10 = sbr.rel (0) target = $region5
    $region4: #{tpu_custom_call.1} parent=1 // pred_region
      _
    $region5: #{tpu_custom_call.1} parent=1 // pred_fallthru
      _
    // Predicated region
    $region6: #{tpu_custom_call.1} parent=1 // pred_check
      _
    $region7: #{tpu_custom_call.1} parent=1 // pred_check_branch
      %12 = sbr.rel (0) target = $region9
    $region8: #{tpu_custom_call.1} parent=1 // pred_region
      _
    $region9: #{tpu_custom_call.1} parent=1 // pred_fallthru
      _
    // Predicated region
    $region10: #{tpu_custom_call.1} parent=1 // pred_check
      _
    $region11: #{tpu_custom_call.1} parent=1 // pred_check_branch
      %14 = sbr.rel (0) target = $region13
    $region12: #{tpu_custom_call.1} parent=1 // pred_region
      _
    $region13: #{tpu_custom_call.1} parent=1 // pred_fallthru
      _
    %v15 = vld [vmem:[%s0] sm:$0xff]
    %v16 = vld [vmem:[%s1] sm:$0xf]
    %v17 = vld [vmem:[%s2] sm:$0x1]
    %v19 = vlaneseq
    %v20 = vshrl.u32 %v19, 7
    %v21 = vsub.s32 0, %v20
    %v22 = vrot.slane %v17, %v21
    %vm24 = vcmask 31744
    %v26 = vsel %vm24, %v15, 0
    %vm28 = vcmask 1043456
    %v30 = vsel %vm28, %v16, 0
    %32 = vmatprep.subr.mxu0 0.0
    %33 = vmatpush1.msra.mxu0 0.0
    %34 = vmatprep.subr.mxu0 0.0
    %35 = vmatpush1.msra.mxu0 0.0
    %36 = vmatprep.subr.mxu0 0.0
    %37 = vmatpush1.msra.mxu0 0.0
    %38 = vmatprep.subr.mxu0 0.0
    %39 = vmatpush1.msra.mxu0 0.0
    %40 = vmatprep.subr.mxu0 0.0
    %41 = vmatpush1.msra.mxu0 0.0
    %42 = vmatprep.subr.mxu0 0.0
    %43 = vmatpush1.msra.mxu0 0.0
    %44 = vmatprep.subr.mxu0 0.0
    %45 = vmatpush1.msra.mxu0 0.0
    %46 = vmatprep.subr.mxu0 0.0
    %47 = vmatpush1.msra.mxu0 0.0
    %48 = vmatprep.subr.mxu0 0.0
    %49 = vmatpush1.msra.mxu0 0.0
    %50 = vmatprep.subr.mxu0 0.0
    %51 = vmatpush1.msra.mxu0 0.0
    %52 = vmatprep.subr.mxu0 0.0
    %53 = vmatpush1.msra.mxu0 0.0
    %54 = vmatprep.subr.mxu0 0.0
    %55 = vmatpush1.msra.mxu0 0.0
    %56 = vmatprep.subr.mxu0 0.0
    %57 = vmatpush1.msra.mxu0 0.0
    %58 = vmatprep.subr.mxu0 0.0
    %59 = vmatpush1.msra.mxu0 0.0
    %60 = vmatprep.subr.mxu0 0.0
    %61 = vmatpush1.msra.mxu0 0.0
    %62 = vmatprep.subr.mxu0 0.0
    %v63 = vand.u32 %v30, 4294901760
    %64 = vmatpush1.msra.mxu0 %v63
    %65 = vmatprep.subr.mxu0 0.0
    %66 = vmatpush2.msra.mxu0 0.0
    %67 = vmatprep.subr.mxu0 0.0
    %68 = vmatpush2.msra.mxu0 0.0
    %69 = vmatprep.subr.mxu0 0.0
    %70 = vmatpush2.msra.mxu0 0.0
    %71 = vmatprep.subr.mxu0 0.0
    %72 = vmatpush2.msra.mxu0 0.0
    %73 = vmatprep.subr.mxu0 0.0
    %74 = vmatpush2.msra.mxu0 0.0
    %75 = vmatprep.subr.mxu0 0.0
    %76 = vmatpush2.msra.mxu0 0.0
    %77 = vmatprep.subr.mxu0 0.0
    %78 = vmatpush2.msra.mxu0 0.0
    %79 = vmatprep.subr.mxu0 0.0
    %80 = vmatpush2.msra.mxu0 0.0
    %81 = vmatprep.subr.mxu0 0.0
    %82 = vmatpush2.msra.mxu0 0.0
    %83 = vmatprep.subr.mxu0 0.0
    %84 = vmatpush2.msra.mxu0 0.0
    %85 = vmatprep.subr.mxu0 0.0
    %86 = vmatpush2.msra.mxu0 0.0
    %87 = vmatprep.subr.mxu0 0.0
    %88 = vmatpush2.msra.mxu0 0.0
    %89 = vmatprep.subr.mxu0 0.0
    %90 = vmatpush2.msra.mxu0 0.0
    %91 = vmatprep.subr.mxu0 0.0
    %92 = vmatpush2.msra.mxu0 0.0
    %93 = vmatprep.subr.mxu0 0.0
    %94 = vmatpush2.msra.mxu0 0.0
    %95 = vmatprep.subr.mxu0 0.0
    %96 = vmatpush2.msra.mxu0 0.0
    %97 = vmatprep.mubr.f32.mxu0 0.0
    %v98 = vand.u32 %v26, 4294901760
    %v99 = vsub.f32 %v26, %v98
    %v100 = vand.u32 %v99, 4294901760
    %v101 = vsub.f32 %v99, %v100
    %v102 = vand.u32 %v101, 4294901760
    %103 = vmatmul.mubr.f32.gmra.mxu0 %v102
    %v104 = vpop.f32.mrf.mxu0
    %v105 = vadd.f32 %v22, %v104
    %v106 = vpop.f32.mrf.mxu0
    %107 = vdwg.mxu0
    %108 = vmatprep.subr.mxu0 0.0
    %109 = vmatpush1.msra.mxu0 0.0
    %110 = vmatprep.subr.mxu0 0.0
    %111 = vmatpush1.msra.mxu0 0.0
    %112 = vmatprep.subr.mxu0 0.0
    %113 = vmatpush1.msra.mxu0 0.0
    %114 = vmatprep.subr.mxu0 0.0
    %115 = vmatpush1.msra.mxu0 0.0
    %116 = vmatprep.subr.mxu0 0.0
    %117 = vmatpush1.msra.mxu0 0.0
    %118 = vmatprep.subr.mxu0 0.0
    %119 = vmatpush1.msra.mxu0 0.0
    %120 = vmatprep.subr.mxu0 0.0
    %121 = vmatpush1.msra.mxu0 0.0
    %122 = vmatprep.subr.mxu0 0.0
    %123 = vmatpush1.msra.mxu0 0.0
    %124 = vmatprep.subr.mxu0 0.0
    %125 = vmatpush1.msra.mxu0 0.0
    %126 = vmatprep.subr.mxu0 0.0
    %127 = vmatpush1.msra.mxu0 0.0
    %128 = vmatprep.subr.mxu0 0.0
    %129 = vmatpush1.msra.mxu0 0.0
    %130 = vmatprep.subr.mxu0 0.0
    %131 = vmatpush1.msra.mxu0 0.0
    %132 = vmatprep.subr.mxu0 0.0
    %133 = vmatpush1.msra.mxu0 0.0
    %134 = vmatprep.subr.mxu0 0.0
    %135 = vmatpush1.msra.mxu0 0.0
    %136 = vmatprep.subr.mxu0 0.0
    %137 = vmatpush1.msra.mxu0 0.0
    %138 = vmatprep.subr.mxu0 0.0
    %v139 = vand.u32 %v30, 4294901760
    %v140 = vsub.f32 %v30, %v139
    %v141 = vand.u32 %v140, 4294901760
    %v142 = vsub.f32 %v140, %v141
    %v143 = vand.u32 %v142, 4294901760
    %144 = vmatpush1.msra.mxu0 %v143
    %145 = vmatprep.subr.mxu0 0.0
    %146 = vmatpush2.msra.mxu0 0.0
    %147 = vmatprep.subr.mxu0 0.0
    %148 = vmatpush2.msra.mxu0 0.0
    %149 = vmatprep.subr.mxu0 0.0
    %150 = vmatpush2.msra.mxu0 0.0
    %151 = vmatprep.subr.mxu0 0.0
    %152 = vmatpush2.msra.mxu0 0.0
    %153 = vmatprep.subr.mxu0 0.0
    %154 = vmatpush2.msra.mxu0 0.0
    %155 = vmatprep.subr.mxu0 0.0
    %156 = vmatpush2.msra.mxu0 0.0
    %157 = vmatprep.subr.mxu0 0.0
    %158 = vmatpush2.msra.mxu0 0.0
    %159 = vmatprep.subr.mxu0 0.0
    %160 = vmatpush2.msra.mxu0 0.0
    %161 = vmatprep.subr.mxu0 0.0
    %162 = vmatpush2.msra.mxu0 0.0
    %163 = vmatprep.subr.mxu0 0.0
    %164 = vmatpush2.msra.mxu0 0.0
    %165 = vmatprep.subr.mxu0 0.0
    %166 = vmatpush2.msra.mxu0 0.0
    %167 = vmatprep.subr.mxu0 0.0
    %168 = vmatpush2.msra.mxu0 0.0
    %169 = vmatprep.subr.mxu0 0.0
    %170 = vmatpush2.msra.mxu0 0.0
    %171 = vmatprep.subr.mxu0 0.0
    %172 = vmatpush2.msra.mxu0 0.0
    %173 = vmatprep.subr.mxu0 0.0
    %174 = vmatpush2.msra.mxu0 0.0
    %175 = vmatprep.subr.mxu0 0.0
    %176 = vmatpush2.msra.mxu0 0.0
    %177 = vmatprep.mubr.f32.mxu0 0.0
    %v178 = vand.u32 %v26, 4294901760
    %179 = vmatmul.mubr.f32.gmra.mxu0 %v178
    %v180 = vpop.f32.mrf.mxu0
    %v181 = vadd.f32 %v105, %v180
    %v182 = vpop.f32.mrf.mxu0
    %183 = vdwg.mxu0
    %184 = vmatprep.subr.mxu0 0.0
    %185 = vmatpush1.msra.mxu0 0.0
    %186 = vmatprep.subr.mxu0 0.0
    %187 = vmatpush1.msra.mxu0 0.0
    %188 = vmatprep.subr.mxu0 0.0
    %189 = vmatpush1.msra.mxu0 0.0
    %190 = vmatprep.subr.mxu0 0.0
    %191 = vmatpush1.msra.mxu0 0.0
    %192 = vmatprep.subr.mxu0 0.0
    %193 = vmatpush1.msra.mxu0 0.0
    %194 = vmatprep.subr.mxu0 0.0
    %195 = vmatpush1.msra.mxu0 0.0
    %196 = vmatprep.subr.mxu0 0.0
    %197 = vmatpush1.msra.mxu0 0.0
    %198 = vmatprep.subr.mxu0 0.0
    %199 = vmatpush1.msra.mxu0 0.0
    %200 = vmatprep.subr.mxu0 0.0
    %201 = vmatpush1.msra.mxu0 0.0
    %202 = vmatprep.subr.mxu0 0.0
    %203 = vmatpush1.msra.mxu0 0.0
    %204 = vmatprep.subr.mxu0 0.0
    %205 = vmatpush1.msra.mxu0 0.0
    %206 = vmatprep.subr.mxu0 0.0
    %207 = vmatpush1.msra.mxu0 0.0
    %208 = vmatprep.subr.mxu0 0.0
    %209 = vmatpush1.msra.mxu0 0.0
    %210 = vmatprep.subr.mxu0 0.0
    %211 = vmatpush1.msra.mxu0 0.0
    %212 = vmatprep.subr.mxu0 0.0
    %213 = vmatpush1.msra.mxu0 0.0
    %214 = vmatprep.subr.mxu0 0.0
    %v215 = vand.u32 %v30, 4294901760
    %v216 = vsub.f32 %v30, %v215
    %217 = vmatpush1.msra.mxu0 %v216
    %218 = vmatprep.subr.mxu0 0.0
    %219 = vmatpush2.msra.mxu0 0.0
    %220 = vmatprep.subr.mxu0 0.0
    %221 = vmatpush2.msra.mxu0 0.0
    %222 = vmatprep.subr.mxu0 0.0
    %223 = vmatpush2.msra.mxu0 0.0
    %224 = vmatprep.subr.mxu0 0.0
    %225 = vmatpush2.msra.mxu0 0.0
    %226 = vmatprep.subr.mxu0 0.0
    %227 = vmatpush2.msra.mxu0 0.0
    %228 = vmatprep.subr.mxu0 0.0
    %229 = vmatpush2.msra.mxu0 0.0
    %230 = vmatprep.subr.mxu0 0.0
    %231 = vmatpush2.msra.mxu0 0.0
    %232 = vmatprep.subr.mxu0 0.0
    %233 = vmatpush2.msra.mxu0 0.0
    %234 = vmatprep.subr.mxu0 0.0
    %235 = vmatpush2.msra.mxu0 0.0
    %236 = vmatprep.subr.mxu0 0.0
    %237 = vmatpush2.msra.mxu0 0.0
    %238 = vmatprep.subr.mxu0 0.0
    %239 = vmatpush2.msra.mxu0 0.0
    %240 = vmatprep.subr.mxu0 0.0
    %241 = vmatpush2.msra.mxu0 0.0
    %242 = vmatprep.subr.mxu0 0.0
    %243 = vmatpush2.msra.mxu0 0.0
    %244 = vmatprep.subr.mxu0 0.0
    %245 = vmatpush2.msra.mxu0 0.0
    %246 = vmatprep.subr.mxu0 0.0
    %247 = vmatpush2.msra.mxu0 0.0
    %248 = vmatprep.subr.mxu0 0.0
    %249 = vmatpush2.msra.mxu0 0.0
    %250 = vmatprep.mubr.f32.mxu0 0.0
    %v251 = vand.u32 %v26, 4294901760
    %v252 = vsub.f32 %v26, %v251
    %253 = vmatmul.mubr.f32.gmra.mxu0 %v252
    %v254 = vpop.f32.mrf.mxu0
    %v255 = vadd.f32 %v181, %v254
    %v256 = vpop.f32.mrf.mxu0
    %257 = vdwg.mxu0
    %258 = vmatprep.subr.mxu0 0.0
    %259 = vmatpush1.msra.mxu0 0.0
    %260 = vmatprep.subr.mxu0 0.0
    %261 = vmatpush1.msra.mxu0 0.0
    %262 = vmatprep.subr.mxu0 0.0
    %263 = vmatpush1.msra.mxu0 0.0
    %264 = vmatprep.subr.mxu0 0.0
    %265 = vmatpush1.msra.mxu0 0.0
    %266 = vmatprep.subr.mxu0 0.0
    %267 = vmatpush1.msra.mxu0 0.0
    %268 = vmatprep.subr.mxu0 0.0
    %269 = vmatpush1.msra.mxu0 0.0
    %270 = vmatprep.subr.mxu0 0.0
    %271 = vmatpush1.msra.mxu0 0.0
    %272 = vmatprep.subr.mxu0 0.0
    %273 = vmatpush1.msra.mxu0 0.0
    %274 = vmatprep.subr.mxu0 0.0
    %275 = vmatpush1.msra.mxu0 0.0
    %276 = vmatprep.subr.mxu0 0.0
    %277 = vmatpush1.msra.mxu0 0.0
    %278 = vmatprep.subr.mxu0 0.0
    %279 = vmatpush1.msra.mxu0 0.0
    %280 = vmatprep.subr.mxu0 0.0
    %281 = vmatpush1.msra.mxu0 0.0
    %282 = vmatprep.subr.mxu0 0.0
    %283 = vmatpush1.msra.mxu0 0.0
    %284 = vmatprep.subr.mxu0 0.0
    %285 = vmatpush1.msra.mxu0 0.0
    %286 = vmatprep.subr.mxu0 0.0
    %287 = vmatpush1.msra.mxu0 0.0
    %288 = vmatprep.subr.mxu0 0.0
    %v289 = vand.u32 %v30, 4294901760
    %290 = vmatpush1.msra.mxu0 %v289
    %291 = vmatprep.subr.mxu0 0.0
    %292 = vmatpush2.msra.mxu0 0.0
    %293 = vmatprep.subr.mxu0 0.0
    %294 = vmatpush2.msra.mxu0 0.0
    %295 = vmatprep.subr.mxu0 0.0
    %296 = vmatpush2.msra.mxu0 0.0
    %297 = vmatprep.subr.mxu0 0.0
    %298 = vmatpush2.msra.mxu0 0.0
    %299 = vmatprep.subr.mxu0 0.0
    %300 = vmatpush2.msra.mxu0 0.0
    %301 = vmatprep.subr.mxu0 0.0
    %302 = vmatpush2.msra.mxu0 0.0
    %303 = vmatprep.subr.mxu0 0.0
    %304 = vmatpush2.msra.mxu0 0.0
    %305 = vmatprep.subr.mxu0 0.0
    %306 = vmatpush2.msra.mxu0 0.0
    %307 = vmatprep.subr.mxu0 0.0
    %308 = vmatpush2.msra.mxu0 0.0
    %309 = vmatprep.subr.mxu0 0.0
    %310 = vmatpush2.msra.mxu0 0.0
    %311 = vmatprep.subr.mxu0 0.0
    %312 = vmatpush2.msra.mxu0 0.0
    %313 = vmatprep.subr.mxu0 0.0
    %314 = vmatpush2.msra.mxu0 0.0
    %315 = vmatprep.subr.mxu0 0.0
    %316 = vmatpush2.msra.mxu0 0.0
    %317 = vmatprep.subr.mxu0 0.0
    %318 = vmatpush2.msra.mxu0 0.0
    %319 = vmatprep.subr.mxu0 0.0
    %320 = vmatpush2.msra.mxu0 0.0
    %321 = vmatprep.subr.mxu0 0.0
    %322 = vmatpush2.msra.mxu0 0.0
    %323 = vmatprep.mubr.f32.mxu0 0.0
    %v324 = vand.u32 %v26, 4294901760
    %v325 = vsub.f32 %v26, %v324
    %v326 = vand.u32 %v325, 4294901760
    %327 = vmatmul.mubr.f32.gmra.mxu0 %v326
    %v328 = vpop.f32.mrf.mxu0
    %v329 = vadd.f32 %v255, %v328
    %v330 = vpop.f32.mrf.mxu0
    %331 = vdwg.mxu0
    %332 = vmatprep.subr.mxu0 0.0
    %333 = vmatpush1.msra.mxu0 0.0
    %334 = vmatprep.subr.mxu0 0.0
    %335 = vmatpush1.msra.mxu0 0.0
    %336 = vmatprep.subr.mxu0 0.0
    %337 = vmatpush1.msra.mxu0 0.0
    %338 = vmatprep.subr.mxu0 0.0
    %339 = vmatpush1.msra.mxu0 0.0
    %340 = vmatprep.subr.mxu0 0.0
    %341 = vmatpush1.msra.mxu0 0.0
    %342 = vmatprep.subr.mxu0 0.0
    %343 = vmatpush1.msra.mxu0 0.0
    %344 = vmatprep.subr.mxu0 0.0
    %345 = vmatpush1.msra.mxu0 0.0
    %346 = vmatprep.subr.mxu0 0.0
    %347 = vmatpush1.msra.mxu0 0.0
    %348 = vmatprep.subr.mxu0 0.0
    %349 = vmatpush1.msra.mxu0 0.0
    %350 = vmatprep.subr.mxu0 0.0
    %351 = vmatpush1.msra.mxu0 0.0
    %352 = vmatprep.subr.mxu0 0.0
    %353 = vmatpush1.msra.mxu0 0.0
    %354 = vmatprep.subr.mxu0 0.0
    %355 = vmatpush1.msra.mxu0 0.0
    %356 = vmatprep.subr.mxu0 0.0
    %357 = vmatpush1.msra.mxu0 0.0
    %358 = vmatprep.subr.mxu0 0.0
    %359 = vmatpush1.msra.mxu0 0.0
    %360 = vmatprep.subr.mxu0 0.0
    %361 = vmatpush1.msra.mxu0 0.0
    %362 = vmatprep.subr.mxu0 0.0
    %v363 = vand.u32 %v30, 4294901760
    %v364 = vsub.f32 %v30, %v363
    %v365 = vand.u32 %v364, 4294901760
    %366 = vmatpush1.msra.mxu0 %v365
    %367 = vmatprep.subr.mxu0 0.0
    %368 = vmatpush2.msra.mxu0 0.0
    %369 = vmatprep.subr.mxu0 0.0
    %370 = vmatpush2.msra.mxu0 0.0
    %371 = vmatprep.subr.mxu0 0.0
    %372 = vmatpush2.msra.mxu0 0.0
    %373 = vmatprep.subr.mxu0 0.0
    %374 = vmatpush2.msra.mxu0 0.0
    %375 = vmatprep.subr.mxu0 0.0
    %376 = vmatpush2.msra.mxu0 0.0
    %377 = vmatprep.subr.mxu0 0.0
    %378 = vmatpush2.msra.mxu0 0.0
    %379 = vmatprep.subr.mxu0 0.0
    %380 = vmatpush2.msra.mxu0 0.0
    %381 = vmatprep.subr.mxu0 0.0
    %382 = vmatpush2.msra.mxu0 0.0
    %383 = vmatprep.subr.mxu0 0.0
    %384 = vmatpush2.msra.mxu0 0.0
    %385 = vmatprep.subr.mxu0 0.0
    %386 = vmatpush2.msra.mxu0 0.0
    %387 = vmatprep.subr.mxu0 0.0
    %388 = vmatpush2.msra.mxu0 0.0
    %389 = vmatprep.subr.mxu0 0.0
    %390 = vmatpush2.msra.mxu0 0.0
    %391 = vmatprep.subr.mxu0 0.0
    %392 = vmatpush2.msra.mxu0 0.0
    %393 = vmatprep.subr.mxu0 0.0
    %394 = vmatpush2.msra.mxu0 0.0
    %395 = vmatprep.subr.mxu0 0.0
    %396 = vmatpush2.msra.mxu0 0.0
    %397 = vmatprep.subr.mxu0 0.0
    %398 = vmatpush2.msra.mxu0 0.0
    %399 = vmatprep.mubr.f32.mxu0 0.0
    %v400 = vand.u32 %v26, 4294901760
    %401 = vmatmul.mubr.f32.gmra.mxu0 %v400
    %v402 = vpop.f32.mrf.mxu0
    %v403 = vadd.f32 %v329, %v402
    %v404 = vpop.f32.mrf.mxu0
    %405 = vdwg.mxu0
    %406 = vmatprep.subr.mxu0 0.0
    %407 = vmatpush1.msra.mxu0 0.0
    %408 = vmatprep.subr.mxu0 0.0
    %409 = vmatpush1.msra.mxu0 0.0
    %410 = vmatprep.subr.mxu0 0.0
    %411 = vmatpush1.msra.mxu0 0.0
    %412 = vmatprep.subr.mxu0 0.0
    %413 = vmatpush1.msra.mxu0 0.0
    %414 = vmatprep.subr.mxu0 0.0
    %415 = vmatpush1.msra.mxu0 0.0
    %416 = vmatprep.subr.mxu0 0.0
    %417 = vmatpush1.msra.mxu0 0.0
    %418 = vmatprep.subr.mxu0 0.0
    %419 = vmatpush1.msra.mxu0 0.0
    %420 = vmatprep.subr.mxu0 0.0
    %421 = vmatpush1.msra.mxu0 0.0
    %422 = vmatprep.subr.mxu0 0.0
    %423 = vmatpush1.msra.mxu0 0.0
    %424 = vmatprep.subr.mxu0 0.0
    %425 = vmatpush1.msra.mxu0 0.0
    %426 = vmatprep.subr.mxu0 0.0
    %427 = vmatpush1.msra.mxu0 0.0
    %428 = vmatprep.subr.mxu0 0.0
    %429 = vmatpush1.msra.mxu0 0.0
    %430 = vmatprep.subr.mxu0 0.0
    %431 = vmatpush1.msra.mxu0 0.0
    %432 = vmatprep.subr.mxu0 0.0
    %433 = vmatpush1.msra.mxu0 0.0
    %434 = vmatprep.subr.mxu0 0.0
    %435 = vmatpush1.msra.mxu0 0.0
    %436 = vmatprep.subr.mxu0 0.0
    %v437 = vand.u32 %v30, 4294901760
    %438 = vmatpush1.msra.mxu0 %v437
    %439 = vmatprep.subr.mxu0 0.0
    %440 = vmatpush2.msra.mxu0 0.0
    %441 = vmatprep.subr.mxu0 0.0
    %442 = vmatpush2.msra.mxu0 0.0
    %443 = vmatprep.subr.mxu0 0.0
    %444 = vmatpush2.msra.mxu0 0.0
    %445 = vmatprep.subr.mxu0 0.0
    %446 = vmatpush2.msra.mxu0 0.0
    %447 = vmatprep.subr.mxu0 0.0
    %448 = vmatpush2.msra.mxu0 0.0
    %449 = vmatprep.subr.mxu0 0.0
    %450 = vmatpush2.msra.mxu0 0.0
    %451 = vmatprep.subr.mxu0 0.0
    %452 = vmatpush2.msra.mxu0 0.0
    %453 = vmatprep.subr.mxu0 0.0
    %454 = vmatpush2.msra.mxu0 0.0
    %455 = vmatprep.subr.mxu0 0.0
    %456 = vmatpush2.msra.mxu0 0.0
    %457 = vmatprep.subr.mxu0 0.0
    %458 = vmatpush2.msra.mxu0 0.0
    %459 = vmatprep.subr.mxu0 0.0
    %460 = vmatpush2.msra.mxu0 0.0
    %461 = vmatprep.subr.mxu0 0.0
    %462 = vmatpush2.msra.mxu0 0.0
    %463 = vmatprep.subr.mxu0 0.0
    %464 = vmatpush2.msra.mxu0 0.0
    %465 = vmatprep.subr.mxu0 0.0
    %466 = vmatpush2.msra.mxu0 0.0
    %467 = vmatprep.subr.mxu0 0.0
    %468 = vmatpush2.msra.mxu0 0.0
    %469 = vmatprep.subr.mxu0 0.0
    %470 = vmatpush2.msra.mxu0 0.0
    %471 = vmatprep.mubr.f32.mxu0 0.0
    %v472 = vand.u32 %v26, 4294901760
    %473 = vmatmul.mubr.f32.gmra.mxu0 %v472
    %v474 = vpop.f32.mrf.mxu0
    %v475 = vadd.f32 %v403, %v474
    %v476 = vpop.f32.mrf.mxu0
    %477 = vdwg.mxu0
    %v478 = vand.u32 2147483647, %v475
    %vm479 = vcmp.le.f32.partialorder %v478, 0.7853982
    %vm480 = vcmp.lt.s32.totalorder %v475, 0
    %v481 = vand.u32 %v475, 2139095040
    %v482 = vshrl.u32 %v481, 23
    %v483 = vsub.s32 %v482, 127
    %v484 = vand.u32 2147483647, %v475
    %v485 = vand.u32 %v484, 8388607
    %v486 = vor.u32 %v485, 8388608
    %v487 = vsub.s32 0, %v486
    %v488 = vadd.s32 %v483, 1
    %vm489 = vcmp.gt.s32.totalorder %v488, 0
    %v490 = vsel %vm489, %v488, 0
    %v491 = vshrl.u32 %v490, 5
    %v492 = vand.u32 %v490, 31
    %v493 = vsub.s32 32, %v492
    %v494 = vshrl.u32 683565275, %v493
    %v495 = vshll.u32 683565275, %v492
    %v496 = vshrl.u32 2475754826, %v493
    %v497 = vor.u32 %v495, %v496
    %v498 = vshll.u32 2475754826, %v492
    %v499 = vshrl.u32 2131351028, %v493
    %v500 = vor.u32 %v498, %v499
    %v501 = vshll.u32 2131351028, %v492
    %v502 = vshrl.u32 2102212464, %v493
    %v503 = vor.u32 %v501, %v502
    %v504 = vshll.u32 2102212464, %v492
    %v505 = vshrl.u32 920167782, %v493
    %v506 = vor.u32 %v504, %v505
    %v507 = vshll.u32 920167782, %v492
    %v508 = vshrl.u32 1326507024, %v493
    %v509 = vor.u32 %v507, %v508
    %vm510 = vcmp.lt.s32.totalorder %v491, 1
    %vm511 = vcmp.lt.s32.totalorder %v491, 2
    %vm512 = vcmp.lt.s32.totalorder %v491, 3
    %vm513 = vcmp.lt.s32.totalorder %v491, 4
    %v514 = vsel %vm510, %v494, %v497
    %v515 = vsel %vm513, %v503, 2102212464
    %v516 = vsel %vm512, %v500, %v515
    %v517 = vsel %vm511, %v514, %v516
    %v518 = vsel %vm510, %v497, %v500
    %v519 = vsel %vm513, %v506, 920167782
    %v520 = vsel %vm512, %v503, %v519
    %v521 = vsel %vm511, %v518, %v520
    %v522 = vsel %vm510, %v500, %v503
    %v523 = vsel %vm513, %v509, 1326507024
    %v524 = vsel %vm512, %v506, %v523
    %v525 = vsel %vm511, %v522, %v524
    %v526 = vshll.u32 %v486, 8
    %v527 = vmul.u32.u64.compose %v526, %v525
    %v528 = vextract.low.u32 %v527
    %v529 = vextract.high.u32 %v527
    %v530 = vmul.u32.u64.compose %v526, %v521
    %v531 = vextract.low.u32 %v530
    %v532 = vextract.high.u32 %v530
    %v533 = vmul.u32 %v526, %v517
    %v534 = vadd.s32 %v529, %v531
    %vm535 = vc.u32 %v529, %v531
    %v536 = vadd.s32 %v532, 1
    %v537 = vsel %vm535, %v536, %v532
    %v538 = vadd.s32 %v533, %v537
    %v539 = vadd.s32 %v538, 536870912
    %v540 = vshrl.u32 %v539, 30
    %v541 = vshll.u32 %v540, 30
    %v542 = vsub.s32 %v538, %v541
    %vm543 = vcmp.lt.s32.totalorder %v542, 0
    %v544 = vsub.s32 0, %v542
    %v545 = vsel %vm543, %v544, %v542
    %v546 = vclz %v545
    %v547 = vsub.s32 %v546, 2
    %vm548 = vcmp.gt.s32.totalorder 0, %v547
    %v549 = vsel %vm548, 0, %v547
    %v550 = vsub.s32 32, %v549
    %v551 = vshll.u32 %v542, %v549
    %v552 = vshrl.u32 %v534, %v550
    %v553 = vor.u32 %v551, %v552
    %v554 = vsub.s32 4294967266, %v549
    %v555 = vadd.s32 %v554, 127
    %v556 = vshll.u32 %v555, 23
    %v557 = vor.u32 4788187, %v556
    %v558 = vand.u32 2147483647, %v557
    %v560 = vcvt.s32.f32 %v553
    %v561 = vmul.f32 %v560, %v558
    %v562 = vxor.u32 %v561, 2147483648
    %v563 = vsel %vm480, %v562, %v561
    %v564 = vsub.s32 4, %v540
    %v565 = vsel %vm480, %v564, %v540
    %v566 = vsel %vm479, %v475, %v563
    %v567 = vsel %vm479, 0, %v565
    %v568 = vcosq.f32.pop %v566
    %v569 = vsinq.f32.pop %v566
    %vm570 = vweird.f32 %v475
    %v571 = vand.u32 %v567, 3
    %vm572 = vcmp.lt.s32.totalorder %v571, 2
    %vm573 = vcmp.eq.s32.totalorder %v571, 0
    %v574 = vxor.u32 %v569, 2147483648
    %v575 = vsel %vm573, %v568, %v574
    %vm576 = vcmp.eq.s32.totalorder %v571, 2
    %v577 = vxor.u32 %v568, 2147483648
    %v578 = vsel %vm576, %v577, %v569
    %v579 = vsel %vm572, %v575, %v578
    %v580 = vsel %vm570, nan, %v579
    %581 = vst [vmem:[#allocation2] sm:$0xff] %v580
    // Predicated region
    $region14: #{tpu_custom_call.1} parent=1 // pred_check
      _
    $region15: #{tpu_custom_call.1} parent=1 // pred_check_branch
      %583 = sbr.rel (0) target = $region17
    $region16: #{tpu_custom_call.1} parent=1 // pred_region
      %s585 = ssub.s32 128, 128
      %586 = vsyncadd [#allocation3], %s585
      %s588 = sshll.u32 [#allocation2], 4
      %s589 = int_to_ptr.vmem [resolvable:$true] %s588
      %591 = dma.vmem_to_hbm [thread:$0]  %s589, 128, %s3, [#allocation3]
    $region17: #{tpu_custom_call.1} parent=1 // pred_fallthru
      _
    // Predicated region
    $region18: #{tpu_custom_call.1} parent=1 // pred_check
      _
    $region19: #{tpu_custom_call.1} parent=1 // pred_check_branch
      %593 = sbr.rel (0) target = $region21
    $region20: #{tpu_custom_call.1} parent=1 // pred_region
      %594 = dma.done [#allocation3], 128
    $region21: #{tpu_custom_call.1} parent=1 // pred_fallthru
      _
    %595 = vsyncpa [#allocation3], 1

</llo_original>
